<compile_context>
chip_gen: v7x
topology: tpu7x:2x2x1
jax: 0.10.0
libtpu: 0.0.40
codegen_flags: <defaults>
</compile_context>

<pallas_src>
import jax
import jax.numpy as jnp
from jax.experimental import pallas as pl
from jax.experimental.pallas import tpu as pltpu


def _round_up(n, m):
    return (n + m - 1) // m * m


def mlp_kernel(x_ref, w1_ref, b1_ref, w2_ref, b2_ref, o_ref):
    # Layer 1: Linear(input_dim, 15) + ReLU  (MXU matmul, VPU bias/relu; f32 epilogue)
    h = jnp.dot(x_ref[...], w1_ref[...], preferred_element_type=jnp.float32)
    h = jnp.maximum(h + b1_ref[...], 0.0)                 # (TB, 15)

    # Layer 2: Linear(15, 1) on the VPU/XLU (no MXU push for K=15, N=1):
    # multiply by the w2 row and reduce over the lane (hidden) axis.
    z = jnp.sum(h * w2_ref[...], axis=-1) + b2_ref[0]     # (TB,)

    # Sigmoid (exp on EUP) and lane-dense store as one (1, TB) row.
    y = 1.0 / (1.0 + jnp.exp(-z))
    o_ref[...] = y[None, :].astype(o_ref.dtype)


def step_ramp_classifier(x, w1, b1, w2, b2, *, batch_tile=1024):
    B, D = x.shape
    H = w1.shape[1]          # 15
    assert w1.shape == (D, H) and b1.shape == (1, H)
    assert w2.shape == (H, 1) and b2.shape == (1, 1)

    # ---- choose batch tile: large, multiple of 8, VMEM-safe on all chips ----
    itemsize = jnp.dtype(x.dtype).itemsize
    # keep the double-buffered x tile <= ~8 MiB (4 MiB per buffer)
    vmem_cap_rows = max(8, (((4 << 20) // (D * itemsize)) // 8) * 8)
    tb = min(batch_tile, _round_up(B, 8), vmem_cap_rows)
    tb = max(8, _round_up(tb, 8))

    Bp = _round_up(B, tb)
    if Bp != B:
        x = jnp.pad(x, ((0, Bp - B), (0, 0)))
    num_tiles = Bp // tb

    w2_row = w2.reshape(1, H)    # (1, 15) row vector for the VPU reduce
    b2_s = b2.reshape(1)         # scalar -> SMEM

    out = pl.pallas_call(
        mlp_kernel,
        out_shape=jax.ShapeDtypeStruct((num_tiles, tb), jnp.float32),
        grid_spec=pltpu.PrefetchScalarGridSpec(
            num_scalar_prefetch=0,
            grid=(num_tiles,),
            in_specs=[
                pl.BlockSpec((tb, D), lambda i: (i, 0)),   # x tile
                pl.BlockSpec((D, H), lambda i: (0, 0)),    # w1 (resident)
                pl.BlockSpec((1, H), lambda i: (0, 0)),    # b1
                pl.BlockSpec((1, H), lambda i: (0, 0)),    # w2 row
                pl.BlockSpec(memory_space=pltpu.MemorySpace.SMEM),  # b2 scalar
            ],
            out_specs=pl.BlockSpec((1, tb), lambda i: (i, 0)),      # lane-dense
        ),
        compiler_params=pltpu.CompilerParams(
            dimension_semantics=("parallel",)),
    )(x, w1, b1, w2_row, b2_s)

    return out.reshape(Bp, 1)[:B]


def init_params(key, input_dim, hidden=15, out=1):
    """Deterministic init mimicking nn.Linear default (uniform +/- 1/sqrt(fan_in))."""
    k1, k2, k3, k4 = jax.random.split(key, 4)
    bound1 = 1.0 / (input_dim ** 0.5)
    bound2 = 1.0 / (hidden ** 0.5)
    w1 = jax.random.uniform(k1, (input_dim, hidden), jnp.float32, -bound1, bound1)
    b1 = jax.random.uniform(k2, (1, hidden), jnp.float32, -bound1, bound1)
    w2 = jax.random.uniform(k3, (hidden, out), jnp.float32, -bound2, bound2)
    b2 = jax.random.uniform(k4, (1, out), jnp.float32, -bound2, bound2)
    return w1, b1, w2, b2


def reference_forward(x, w1, b1, w2, b2):
    h = jnp.maximum(x @ w1 + b1, 0.0)
    return jax.nn.sigmoid(h @ w2 + b2)


if __name__ == "__main__":
    key = jax.random.PRNGKey(0)
    kx, kp = jax.random.split(key)

    B, D = 100, 32                      # batch=100 (exercises padding), input_dim=32
    x = jax.random.normal(kx, (B, D), dtype=jnp.float32)
    w1, b1, w2, b2 = init_params(kp, D)

    ref = reference_forward(x, w1, b1, w2, b2)

    # Single large tile (tile clamped to the padded batch).
    out = jax.block_until_ready(step_ramp_classifier(x, w1, b1, w2, b2))
    assert out.shape == (B, 1)
    assert jnp.allclose(out, ref, atol=1e-5, rtol=1e-5), "mismatch vs reference (large tile)"

    # Multi-tile grid (exercises the pipelined grid + padding path).
    out2 = jax.block_until_ready(step_ramp_classifier(x, w1, b1, w2, b2, batch_tile=8))
    assert jnp.allclose(out2, ref, atol=1e-5, rtol=1e-5), "mismatch vs reference (multi tile)"

    print("KERNEL_OK")
</pallas_src>

<mosaic_0001>
module attributes {stable_mosaic.version = 11 : i64} {
  func.func @mlp_kernel(%arg0: i32, %arg1: memref<104x32xf32, #tpu.memory_space<vmem>>, %arg2: memref<32x15xf32, #tpu.memory_space<vmem>>, %arg3: memref<1x15xf32, #tpu.memory_space<vmem>>, %arg4: memref<1x15xf32, #tpu.memory_space<vmem>>, %arg5: memref<1xf32, #tpu.memory_space<smem>>, %arg6: memref<1x104xf32, #tpu.memory_space<vmem>>) attributes {dimension_semantics = [#tpu.dimension_semantics<parallel>], iteration_bounds = array<i64: 1>, scalar_prefetch = 0 : i64, scratch_operands = 0 : i64, tpu.core_type = #tpu.core_type<tc>, window_params = [{transform_indices = @transform_0, window_bounds = array<i64: 104, 32>}, {pipeline_mode = #tpu.pipeline_mode<synchronous>, transform_indices = @transform_1, window_bounds = array<i64: 32, 15>}, {pipeline_mode = #tpu.pipeline_mode<synchronous>, transform_indices = @transform_2, window_bounds = array<i64: 1, 15>}, {pipeline_mode = #tpu.pipeline_mode<synchronous>, transform_indices = @transform_3, window_bounds = array<i64: 1, 15>}, {transform_indices = @transform_4, window_bounds = array<i64: 1>}, {transform_indices = @transform_5, window_bounds = array<i64: 1, 104>}]} {
    %c0 = arith.constant 0 : index
    %c0_0 = arith.constant 0 : index
    %0 = vector.load %arg1[%c0, %c0_0] : memref<104x32xf32, #tpu.memory_space<vmem>>, vector<104x32xf32>
    %c0_1 = arith.constant 0 : index
    %c0_2 = arith.constant 0 : index
    %1 = vector.load %arg2[%c0_1, %c0_2] : memref<32x15xf32, #tpu.memory_space<vmem>>, vector<32x15xf32>
    %cst = arith.constant dense<0.000000e+00> : vector<104x15xf32>
    %2 = tpu.matmul %0, %1, %cst {dimension_numbers = #tpu.dot_dimension_numbers<[1], [0], [0], [1], [0, 0, 1, 1], [], []>} : vector<104x32xf32>, vector<32x15xf32>, vector<104x15xf32> -> vector<104x15xf32>
    %c0_3 = arith.constant 0 : index
    %c0_4 = arith.constant 0 : index
    %3 = vector.load %arg3[%c0_3, %c0_4] : memref<1x15xf32, #tpu.memory_space<vmem>>, vector<1x15xf32>
    %4 = vector.broadcast %3 : vector<1x15xf32> to vector<104x15xf32>
    %5 = arith.addf %2, %4 : vector<104x15xf32>
    %cst_5 = arith.constant 0.000000e+00 : f32
    %6 = vector.broadcast %cst_5 : f32 to vector<104x15xf32>
    %7 = arith.maximumf %5, %6 : vector<104x15xf32>
    %c0_6 = arith.constant 0 : index
    %c0_7 = arith.constant 0 : index
    %8 = vector.load %arg4[%c0_6, %c0_7] : memref<1x15xf32, #tpu.memory_space<vmem>>, vector<1x15xf32>
    %9 = vector.broadcast %8 : vector<1x15xf32> to vector<104x15xf32>
    %10 = arith.mulf %7, %9 : vector<104x15xf32>
    %cst_8 = arith.constant dense<0.000000e+00> : vector<104xf32>
    %11 = vector.multi_reduction <add>, %10, %cst_8 [1] : vector<104x15xf32> to vector<104xf32>
    %c0_9 = arith.constant 0 : index
    %12 = memref.load %arg5[%c0_9] : memref<1xf32, #tpu.memory_space<smem>>
    %13 = vector.broadcast %12 : f32 to vector<104xf32>
    %14 = arith.addf %11, %13 : vector<104xf32>
    %cst_10 = arith.constant 0.000000e+00 : f32
    %15 = vector.broadcast %cst_10 : f32 to vector<104xf32>
    %16 = arith.subf %15, %14 : vector<104xf32>
    %17 = math.exp %16 : vector<104xf32>
    %cst_11 = arith.constant 1.000000e+00 : f32
    %18 = vector.broadcast %cst_11 : f32 to vector<104xf32>
    %19 = arith.addf %18, %17 : vector<104xf32>
    %cst_12 = arith.constant 1.000000e+00 : f32
    %20 = vector.broadcast %cst_12 : f32 to vector<104xf32>
    %21 = arith.divf %20, %19 : vector<104xf32>
    %22 = vector.shape_cast %21 : vector<104xf32> to vector<1x104xf32>
    %c0_13 = arith.constant 0 : index
    %c0_14 = arith.constant 0 : index
    %23 = vector.load %arg6[%c0_13, %c0_14] : memref<1x104xf32, #tpu.memory_space<vmem>>, vector<1x104xf32>
    tpu.vector_store %arg6[%c0_13, %c0_14], %22 {strides = array<i32>} : memref<1x104xf32, #tpu.memory_space<vmem>>, vector<1x104xf32>,
    return
  }
  func.func @transform_0(%arg0: i32) -> (i32, i32) {
    %c0_i32 = arith.constant 0 : i32
    %c0_i32_0 = arith.constant 0 : i32
    return %arg0, %c0_i32 : i32, i32
  }
  func.func @transform_1(%arg0: i32) -> (i32, i32) {
    %c0_i32 = arith.constant 0 : i32
    %c0_i32_0 = arith.constant 0 : i32
    %c0_i32_1 = arith.constant 0 : i32
    return %c0_i32, %c0_i32_0 : i32, i32
  }
  func.func @transform_2(%arg0: i32) -> (i32, i32) {
    %c0_i32 = arith.constant 0 : i32
    %c0_i32_0 = arith.constant 0 : i32
    %c0_i32_1 = arith.constant 0 : i32
    return %c0_i32, %c0_i32_0 : i32, i32
  }
  func.func @transform_3(%arg0: i32) -> (i32, i32) {
    %c0_i32 = arith.constant 0 : i32
    %c0_i32_0 = arith.constant 0 : i32
    %c0_i32_1 = arith.constant 0 : i32
    return %c0_i32, %c0_i32_0 : i32, i32
  }
  func.func @transform_4(%arg0: i32) -> i32 {
    %c0_i32 = arith.constant 0 : i32
    %c0_i32_0 = arith.constant 0 : i32
    return %c0_i32 : i32
  }
  func.func @transform_5(%arg0: i32) -> (i32, i32) {
    %c0_i32 = arith.constant 0 : i32
    %c0_i32_0 = arith.constant 0 : i32
    return %arg0, %c0_i32 : i32, i32
  }
}

</mosaic_0001>

<llo_original>
// kernel: tpu_custom_call.1
$region0: #{tpu_custom_call.1}
  #allocation0 [shape = 'u32[]', space=smem, size = 0x4, offset = 0x4, fixed_abs, tag = 'smem constant byte address 0x4 - core index']
  #allocation1 [shape = 'u32[144,128]{1,0:T(1,128)}', space=vmem, size = 0x12000, scoped, tag = 'internal scratch']
  #allocation2 [shape = 'f32[1]{0:T(128)S(6)}', space=smem, size = 0x200, scoped, tag = 'scoped memory for tpu_custom_call.1']
  %s0 = inlined_call_operand.vmem [shape: f32[104,32], index: 0, kind: input, shape index: {}]
  %s1 = inlined_call_operand.vmem [shape: f32[32,15], index: 1, kind: input, shape index: {}]
  %s2 = inlined_call_operand.vmem [shape: f32[1,15], index: 2, kind: input, shape index: {}]
  %s3 = inlined_call_operand.vmem [shape: f32[1,15], index: 3, kind: input, shape index: {}]
  %s4 = inlined_call_operand.<no memory space> [shape: f32[1], index: 4, kind: input, shape index: {}]
  %s5 = inlined_call_operand.hbm [shape: f32[1,104], index: 5, kind: output, shape index: {}]
  %s6 = sld [smem:[#allocation0]]
  $region30: #{tpu_custom_call.1} parent=0
    _
  %s8 = ssub.s32 1, %s6
  %s9 = scalar_select 0, %s8, %s6
  %10 = sst [smem:[#allocation2]] %s4
  $region1: #{tpu_custom_call.1} parent=0
    #allocation3 [shape = 'u8[512]{0}', space=vmem, size = 0x400, scoped, tag = 'output window, operand 0, single buffered']
    #allocation4 [shape = 's32[1]{0}', space=sflag, size = 0x4, scoped, tag = 'scoped memory for tpu_custom_call.1']
    %11 = vsyncpa [#allocation4], 0
    // Predicated region
    $region2: #{tpu_custom_call.1} parent=1 // pred_check
      _
    $region3: #{tpu_custom_call.1} parent=1 // pred_check_branch
      %13 = sbr.rel (0) target = $region5
    $region4: #{tpu_custom_call.1} parent=1 // pred_region
      _
    $region5: #{tpu_custom_call.1} parent=1 // pred_fallthru
      _
    // Predicated region
    $region6: #{tpu_custom_call.1} parent=1 // pred_check
      _
    $region7: #{tpu_custom_call.1} parent=1 // pred_check_branch
      %15 = sbr.rel (0) target = $region9
    $region8: #{tpu_custom_call.1} parent=1 // pred_region
      _
    $region9: #{tpu_custom_call.1} parent=1 // pred_fallthru
      _
    // Predicated region
    $region10: #{tpu_custom_call.1} parent=1 // pred_check
      _
    $region11: #{tpu_custom_call.1} parent=1 // pred_check_branch
      %17 = sbr.rel (0) target = $region13
    $region12: #{tpu_custom_call.1} parent=1 // pred_region
      _
    $region13: #{tpu_custom_call.1} parent=1 // pred_fallthru
      _
    // Predicated region
    $region14: #{tpu_custom_call.1} parent=1 // pred_check
      _
    $region15: #{tpu_custom_call.1} parent=1 // pred_check_branch
      %19 = sbr.rel (0) target = $region17
    $region16: #{tpu_custom_call.1} parent=1 // pred_region
      _
    $region17: #{tpu_custom_call.1} parent=1 // pred_fallthru
      _
    // Predicated region
    $region18: #{tpu_custom_call.1} parent=1 // pred_check
      _
    $region19: #{tpu_custom_call.1} parent=1 // pred_check_branch
      %21 = sbr.rel (0) target = $region21
    $region20: #{tpu_custom_call.1} parent=1 // pred_region
      _
    $region21: #{tpu_custom_call.1} parent=1 // pred_fallthru
      _
    %v22 = vld [vmem:[%s0] sm:$0xff]
    %v23 = vld [vmem:[%s0 + $0x8] sm:$0xff]
    %v24 = vld [vmem:[%s0 + $0x10] sm:$0xff]
    %v25 = vld [vmem:[%s0 + $0x18] sm:$0xff]
    %v26 = vld [vmem:[%s0 + $0x20] sm:$0xff]
    %v27 = vld [vmem:[%s0 + $0x28] sm:$0xff]
    %v28 = vld [vmem:[%s0 + $0x30] sm:$0xff]
    %v29 = vld [vmem:[%s0 + $0x38] sm:$0xff]
    %v30 = vld [vmem:[%s0 + $0x40] sm:$0xff]
    %v31 = vld [vmem:[%s0 + $0x48] sm:$0xff]
    %v32 = vld [vmem:[%s0 + $0x50] sm:$0xff]
    %v33 = vld [vmem:[%s0 + $0x58] sm:$0xff]
    %v34 = vld [vmem:[%s0 + $0x60] sm:$0xff]
    %v35 = vld [vmem:[%s1] sm:$0xff]
    %v36 = vld [vmem:[%s1 + $0x8] sm:$0xff]
    %v37 = vld [vmem:[%s1 + $0x10] sm:$0xff]
    %v38 = vld [vmem:[%s1 + $0x18] sm:$0xff]
    %v39 = vld [vmem:[%s2] sm:$0x1]
    %v41 = vlaneseq
    %v42 = vshrl.u32 %v41, 7
    %v43 = vsub.s32 0, %v42
    %v44 = vrot.slane %v39, %v43
    %vm46 = vcmask 261120
    %v48 = vsel %vm46, %v22, 0
    %v51 = vsel %vm46, %v23, 0
    %v54 = vsel %vm46, %v24, 0
    %v57 = vsel %vm46, %v25, 0
    %v60 = vsel %vm46, %v26, 0
    %v63 = vsel %vm46, %v27, 0
    %v66 = vsel %vm46, %v28, 0
    %v69 = vsel %vm46, %v29, 0
    %v72 = vsel %vm46, %v30, 0
    %v75 = vsel %vm46, %v31, 0
    %v78 = vsel %vm46, %v32, 0
    %v81 = vsel %vm46, %v33, 0
    %v84 = vsel %vm46, %v34, 0
    %86 = vmatprep.subr.mxu0 0.0
    %87 = vmatpush1.msra.mxu0 %v35
    %88 = vmatprep.subr.mxu0 0.0
    %89 = vmatpush1.msra.mxu0 %v36
    %90 = vmatprep.subr.mxu0 0.0
    %91 = vmatpush1.msra.mxu0 %v37
    %92 = vmatprep.subr.mxu0 0.0
    %93 = vmatpush1.msra.mxu0 %v38
    %94 = vmatprep.subr.mxu0 0.0
    %95 = vmatpush1.msra.mxu0 0.0
    %96 = vmatprep.subr.mxu0 0.0
    %97 = vmatpush1.msra.mxu0 0.0
    %98 = vmatprep.subr.mxu0 0.0
    %99 = vmatpush1.msra.mxu0 0.0
    %100 = vmatprep.subr.mxu0 0.0
    %101 = vmatpush1.msra.mxu0 0.0
    %102 = vmatprep.subr.mxu0 0.0
    %103 = vmatpush1.msra.mxu0 0.0
    %104 = vmatprep.subr.mxu0 0.0
    %105 = vmatpush1.msra.mxu0 0.0
    %106 = vmatprep.subr.mxu0 0.0
    %107 = vmatpush1.msra.mxu0 0.0
    %108 = vmatprep.subr.mxu0 0.0
    %109 = vmatpush1.msra.mxu0 0.0
    %110 = vmatprep.subr.mxu0 0.0
    %111 = vmatpush1.msra.mxu0 0.0
    %112 = vmatprep.subr.mxu0 0.0
    %113 = vmatpush1.msra.mxu0 0.0
    %114 = vmatprep.subr.mxu0 0.0
    %115 = vmatpush1.msra.mxu0 0.0
    %116 = vmatprep.subr.mxu0 0.0
    %117 = vmatpush1.msra.mxu0 0.0
    %118 = vmatprep.subr.mxu0 0.0
    %119 = vmatpush1.msra.mxu0 0.0
    %120 = vmatprep.subr.mxu0 0.0
    %121 = vmatpush1.msra.mxu0 0.0
    %122 = vmatprep.subr.mxu0 0.0
    %123 = vmatpush1.msra.mxu0 0.0
    %124 = vmatprep.subr.mxu0 0.0
    %125 = vmatpush1.msra.mxu0 0.0
    %126 = vmatprep.subr.mxu0 0.0
    %127 = vmatpush1.msra.mxu0 0.0
    %128 = vmatprep.subr.mxu0 0.0
    %129 = vmatpush1.msra.mxu0 0.0
    %130 = vmatprep.subr.mxu0 0.0
    %131 = vmatpush1.msra.mxu0 0.0
    %132 = vmatprep.subr.mxu0 0.0
    %133 = vmatpush1.msra.mxu0 0.0
    %134 = vmatprep.subr.mxu0 0.0
    %135 = vmatpush1.msra.mxu0 0.0
    %136 = vmatprep.subr.mxu0 0.0
    %137 = vmatpush1.msra.mxu0 0.0
    %138 = vmatprep.subr.mxu0 0.0
    %139 = vmatpush1.msra.mxu0 0.0
    %140 = vmatprep.subr.mxu0 0.0
    %141 = vmatpush1.msra.mxu0 0.0
    %142 = vmatprep.subr.mxu0 0.0
    %143 = vmatpush1.msra.mxu0 0.0
    %144 = vmatprep.subr.mxu0 0.0
    %145 = vmatpush1.msra.mxu0 0.0
    %146 = vmatprep.subr.mxu0 0.0
    %147 = vmatpush1.msra.mxu0 0.0
    %148 = vmatprep.subr.mxu0 0.0
    %149 = vmatpush1.msra.mxu0 0.0
    %150 = vmatprep.mubr.f32.mxu0 0.0
    %151 = vmatmul.mubr.f32.gmra.mrb[0].mxu0 %v48
    %v152 = vpop.f32.mrb[0].mxu0
    %v153 = vadd.f32 %v44, %v152
    %v154 = vpop.f32.mrb[0].mxu0
    %155 = vmatprep.mubr.f32.mxu0 0.0
    %156 = vmatmul.mubr.f32.gmra.mrb[0].mxu0 %v51
    %v157 = vpop.f32.mrb[0].mxu0
    %v158 = vadd.f32 %v44, %v157
    %v159 = vpop.f32.mrb[0].mxu0
    %160 = vmatprep.mubr.f32.mxu0 0.0
    %161 = vmatmul.mubr.f32.gmra.mrb[0].mxu0 %v54
    %v162 = vpop.f32.mrb[0].mxu0
    %v163 = vadd.f32 %v44, %v162
    %v164 = vpop.f32.mrb[0].mxu0
    %165 = vmatprep.mubr.f32.mxu0 0.0
    %166 = vmatmul.mubr.f32.gmra.mrb[0].mxu0 %v57
    %v167 = vpop.f32.mrb[0].mxu0
    %v168 = vadd.f32 %v44, %v167
    %v169 = vpop.f32.mrb[0].mxu0
    %170 = vmatprep.mubr.f32.mxu0 0.0
    %171 = vmatmul.mubr.f32.gmra.mrb[0].mxu0 %v60
    %v172 = vpop.f32.mrb[0].mxu0
    %v173 = vadd.f32 %v44, %v172
    %v174 = vpop.f32.mrb[0].mxu0
    %175 = vmatprep.mubr.f32.mxu0 0.0
    %176 = vmatmul.mubr.f32.gmra.mrb[0].mxu0 %v63
    %v177 = vpop.f32.mrb[0].mxu0
    %v178 = vadd.f32 %v44, %v177
    %v179 = vpop.f32.mrb[0].mxu0
    %180 = vmatprep.mubr.f32.mxu0 0.0
    %181 = vmatmul.mubr.f32.gmra.mrb[0].mxu0 %v66
    %v182 = vpop.f32.mrb[0].mxu0
    %v183 = vadd.f32 %v44, %v182
    %v184 = vpop.f32.mrb[0].mxu0
    %185 = vmatprep.mubr.f32.mxu0 0.0
    %186 = vmatmul.mubr.f32.gmra.mrb[0].mxu0 %v69
    %v187 = vpop.f32.mrb[0].mxu0
    %v188 = vadd.f32 %v44, %v187
    %v189 = vpop.f32.mrb[0].mxu0
    %190 = vmatprep.mubr.f32.mxu0 0.0
    %191 = vmatmul.mubr.f32.gmra.mrb[0].mxu0 %v72
    %v192 = vpop.f32.mrb[0].mxu0
    %v193 = vadd.f32 %v44, %v192
    %v194 = vpop.f32.mrb[0].mxu0
    %195 = vmatprep.mubr.f32.mxu0 0.0
    %196 = vmatmul.mubr.f32.gmra.mrb[0].mxu0 %v75
    %v197 = vpop.f32.mrb[0].mxu0
    %v198 = vadd.f32 %v44, %v197
    %v199 = vpop.f32.mrb[0].mxu0
    %200 = vmatprep.mubr.f32.mxu0 0.0
    %201 = vmatmul.mubr.f32.gmra.mrb[0].mxu0 %v78
    %v202 = vpop.f32.mrb[0].mxu0
    %v203 = vadd.f32 %v44, %v202
    %v204 = vpop.f32.mrb[0].mxu0
    %205 = vmatprep.mubr.f32.mxu0 0.0
    %206 = vmatmul.mubr.f32.gmra.mrb[0].mxu0 %v81
    %v207 = vpop.f32.mrb[0].mxu0
    %v208 = vadd.f32 %v44, %v207
    %v209 = vpop.f32.mrb[0].mxu0
    %210 = vmatprep.mubr.f32.mxu0 0.0
    %211 = vmatmul.mubr.f32.gmra.mrb[0].mxu0 %v84
    %v212 = vpop.f32.mrb[0].mxu0
    %v213 = vadd.f32 %v44, %v212
    %v214 = vpop.f32.mrb[0].mxu0
    %215 = vdwg.mxu0
    %v216 = vmax.f32 %v153, 0.0
    %v217 = vmax.f32 %v158, 0.0
    %v218 = vmax.f32 %v163, 0.0
    %v219 = vmax.f32 %v168, 0.0
    %v220 = vmax.f32 %v173, 0.0
    %v221 = vmax.f32 %v178, 0.0
    %v222 = vmax.f32 %v183, 0.0
    %v223 = vmax.f32 %v188, 0.0
    %v224 = vmax.f32 %v193, 0.0
    %v225 = vmax.f32 %v198, 0.0
    %v226 = vmax.f32 %v203, 0.0
    %v227 = vmax.f32 %v208, 0.0
    %v228 = vmax.f32 %v213, 0.0
    %v229 = vld [vmem:[%s3] sm:$0x1]
    %v231 = vlaneseq
    %v232 = vshrl.u32 %v231, 7
    %v233 = vsub.s32 0, %v232
    %v234 = vrot.slane %v229, %v233
    %v236 = vmul.f32 %v216, %v234
    %v237 = vmul.f32 %v217, %v234
    %v238 = vmul.f32 %v218, %v234
    %v239 = vmul.f32 %v219, %v234
    %v240 = vmul.f32 %v220, %v234
    %v241 = vmul.f32 %v221, %v234
    %v242 = vmul.f32 %v222, %v234
    %v243 = vmul.f32 %v223, %v234
    %v244 = vmul.f32 %v224, %v234
    %v245 = vmul.f32 %v225, %v234
    %v246 = vmul.f32 %v226, %v234
    %v247 = vmul.f32 %v227, %v234
    %v248 = vmul.f32 %v228, %v234
    %vm249 = vcmask 121856
    %v250 = vsel %vm249, %v236, 0.0
    %251 = vadd.xlane.f32.xlu0 %v250
    %v252 = vpop.xlane.xlu0 %251
    %v253 = vsel %vm249, %v237, 0.0
    %254 = vadd.xlane.f32.xlu0 %v253
    %v255 = vpop.xlane.xlu0 %254
    %v256 = vsel %vm249, %v238, 0.0
    %257 = vadd.xlane.f32.xlu0 %v256
    %v258 = vpop.xlane.xlu0 %257
    %v259 = vsel %vm249, %v239, 0.0
    %260 = vadd.xlane.f32.xlu0 %v259
    %v261 = vpop.xlane.xlu0 %260
    %v262 = vsel %vm249, %v240, 0.0
    %263 = vadd.xlane.f32.xlu0 %v262
    %v264 = vpop.xlane.xlu0 %263
    %v265 = vsel %vm249, %v241, 0.0
    %266 = vadd.xlane.f32.xlu0 %v265
    %v267 = vpop.xlane.xlu0 %266
    %v268 = vsel %vm249, %v242, 0.0
    %269 = vadd.xlane.f32.xlu0 %v268
    %v270 = vpop.xlane.xlu0 %269
    %v271 = vsel %vm249, %v243, 0.0
    %272 = vadd.xlane.f32.xlu0 %v271
    %v273 = vpop.xlane.xlu0 %272
    %v274 = vsel %vm249, %v244, 0.0
    %275 = vadd.xlane.f32.xlu0 %v274
    %v276 = vpop.xlane.xlu0 %275
    %v277 = vsel %vm249, %v245, 0.0
    %278 = vadd.xlane.f32.xlu0 %v277
    %v279 = vpop.xlane.xlu0 %278
    %v280 = vsel %vm249, %v246, 0.0
    %281 = vadd.xlane.f32.xlu0 %v280
    %v282 = vpop.xlane.xlu0 %281
    %v283 = vsel %vm249, %v247, 0.0
    %284 = vadd.xlane.f32.xlu0 %v283
    %v285 = vpop.xlane.xlu0 %284
    %v286 = vsel %vm249, %v248, 0.0
    %287 = vadd.xlane.f32.xlu0 %v286
    %v288 = vpop.xlane.xlu0 %287
    %s289 = sld [smem:[#allocation2]]
    %v290 = vstv %s289
    %v291 = vadd.f32 %v252, %v290
    %v292 = vadd.f32 %v255, %v290
    %v293 = vadd.f32 %v258, %v290
    %v294 = vadd.f32 %v261, %v290
    %v295 = vadd.f32 %v264, %v290
    %v296 = vadd.f32 %v267, %v290
    %v297 = vadd.f32 %v270, %v290
    %v298 = vadd.f32 %v273, %v290
    %v299 = vadd.f32 %v276, %v290
    %v300 = vadd.f32 %v279, %v290
    %v301 = vadd.f32 %v282, %v290
    %v302 = vadd.f32 %v285, %v290
    %v303 = vadd.f32 %v288, %v290
    %v304 = vsub.f32 0.0, %v291
    %v305 = vsub.f32 0.0, %v292
    %v306 = vsub.f32 0.0, %v293
    %v307 = vsub.f32 0.0, %v294
    %v308 = vsub.f32 0.0, %v295
    %v309 = vsub.f32 0.0, %v296
    %v310 = vsub.f32 0.0, %v297
    %v311 = vsub.f32 0.0, %v298
    %v312 = vsub.f32 0.0, %v299
    %v313 = vsub.f32 0.0, %v300
    %v314 = vsub.f32 0.0, %v301
    %v315 = vsub.f32 0.0, %v302
    %v316 = vsub.f32 0.0, %v303
    %v317 = vmul.f32 %v304, 1.442695
    %v318 = vpow.pop %v317
    %v319 = vmul.f32 %v305, 1.442695
    %v320 = vpow.pop %v319
    %v321 = vmul.f32 %v306, 1.442695
    %v322 = vpow.pop %v321
    %v323 = vmul.f32 %v307, 1.442695
    %v324 = vpow.pop %v323
    %v325 = vmul.f32 %v308, 1.442695
    %v326 = vpow.pop %v325
    %v327 = vmul.f32 %v309, 1.442695
    %v328 = vpow.pop %v327
    %v329 = vmul.f32 %v310, 1.442695
    %v330 = vpow.pop %v329
    %v331 = vmul.f32 %v311, 1.442695
    %v332 = vpow.pop %v331
    %v333 = vmul.f32 %v312, 1.442695
    %v334 = vpow.pop %v333
    %v335 = vmul.f32 %v313, 1.442695
    %v336 = vpow.pop %v335
    %v337 = vmul.f32 %v314, 1.442695
    %v338 = vpow.pop %v337
    %v339 = vmul.f32 %v315, 1.442695
    %v340 = vpow.pop %v339
    %v341 = vmul.f32 %v316, 1.442695
    %v342 = vpow.pop %v341
    %v343 = vadd.f32 %v318, 1.0
    %v344 = vadd.f32 %v320, 1.0
    %v345 = vadd.f32 %v322, 1.0
    %v346 = vadd.f32 %v324, 1.0
    %v347 = vadd.f32 %v326, 1.0
    %v348 = vadd.f32 %v328, 1.0
    %v349 = vadd.f32 %v330, 1.0
    %v350 = vadd.f32 %v332, 1.0
    %v351 = vadd.f32 %v334, 1.0
    %v352 = vadd.f32 %v336, 1.0
    %v353 = vadd.f32 %v338, 1.0
    %v354 = vadd.f32 %v340, 1.0
    %v355 = vadd.f32 %v342, 1.0
    %v356 = vrcp.pop %v343
    %v357 = vmul.f32 1.0, %v356
    %v358 = vrcp.pop %v344
    %v359 = vmul.f32 1.0, %v358
    %v360 = vrcp.pop %v345
    %v361 = vmul.f32 1.0, %v360
    %v362 = vrcp.pop %v346
    %v363 = vmul.f32 1.0, %v362
    %v364 = vrcp.pop %v347
    %v365 = vmul.f32 1.0, %v364
    %v366 = vrcp.pop %v348
    %v367 = vmul.f32 1.0, %v366
    %v368 = vrcp.pop %v349
    %v369 = vmul.f32 1.0, %v368
    %v370 = vrcp.pop %v350
    %v371 = vmul.f32 1.0, %v370
    %v372 = vrcp.pop %v351
    %v373 = vmul.f32 1.0, %v372
    %v374 = vrcp.pop %v352
    %v375 = vmul.f32 1.0, %v374
    %v376 = vrcp.pop %v353
    %v377 = vmul.f32 1.0, %v376
    %v378 = vrcp.pop %v354
    %v379 = vmul.f32 1.0, %v378
    %v380 = vrcp.pop %v355
    %v381 = vmul.f32 1.0, %v380
    %v395 = vlaneseq
    %v396 = vand.u32 %v395, 127
    %v397 = vlaneseq
    %v398 = vshrl.u32 %v397, 7
    %v399 = vsub.s32 %v396, %v398
    %v400 = vrot.slane %v357, %v399
    %v401 = vadd.s32 %v396, 4294967288
    %v402 = vlaneseq
    %v403 = vshrl.u32 %v402, 7
    %v404 = vsub.s32 %v401, %v403
    %v405 = vrot.slane %v359, %v404
    %vm406 = vcmask 130112
    %v407 = vsel %vm406, %v405, %v400
    %v408 = vadd.s32 %v396, 4294967280
    %v409 = vlaneseq
    %v410 = vshrl.u32 %v409, 7
    %v411 = vsub.s32 %v408, %v410
    %v412 = vrot.slane %v361, %v411
    %vm413 = vcmask 195712
    %v414 = vsel %vm413, %v412, %v407
    %v415 = vadd.s32 %v396, 4294967272
    %v416 = vlaneseq
    %v417 = vshrl.u32 %v416, 7
    %v418 = vsub.s32 %v415, %v417
    %v419 = vrot.slane %v363, %v418
    %vm420 = vcmask 261312
    %v421 = vsel %vm420, %v419, %v414
    %v422 = vadd.s32 %v396, 4294967264
    %v423 = vlaneseq
    %v424 = vshrl.u32 %v423, 7
    %v425 = vsub.s32 %v422, %v424
    %v426 = vrot.slane %v365, %v425
    %vm427 = vcmask 326912
    %v428 = vsel %vm427, %v426, %v421
    %v429 = vadd.s32 %v396, 4294967256
    %v430 = vlaneseq
    %v431 = vshrl.u32 %v430, 7
    %v432 = vsub.s32 %v429, %v431
    %v433 = vrot.slane %v367, %v432
    %vm434 = vcmask 392512
    %v435 = vsel %vm434, %v433, %v428
    %v436 = vadd.s32 %v396, 4294967248
    %v437 = vlaneseq
    %v438 = vshrl.u32 %v437, 7
    %v439 = vsub.s32 %v436, %v438
    %v440 = vrot.slane %v369, %v439
    %vm441 = vcmask 458112
    %v442 = vsel %vm441, %v440, %v435
    %v443 = vadd.s32 %v396, 4294967240
    %v444 = vlaneseq
    %v445 = vshrl.u32 %v444, 7
    %v446 = vsub.s32 %v443, %v445
    %v447 = vrot.slane %v371, %v446
    %vm448 = vcmask 523712
    %v449 = vsel %vm448, %v447, %v442
    %v450 = vadd.s32 %v396, 4294967232
    %v451 = vlaneseq
    %v452 = vshrl.u32 %v451, 7
    %v453 = vsub.s32 %v450, %v452
    %v454 = vrot.slane %v373, %v453
    %vm455 = vcmask 589312
    %v456 = vsel %vm455, %v454, %v449
    %v457 = vadd.s32 %v396, 4294967224
    %v458 = vlaneseq
    %v459 = vshrl.u32 %v458, 7
    %v460 = vsub.s32 %v457, %v459
    %v461 = vrot.slane %v375, %v460
    %vm462 = vcmask 654912
    %v463 = vsel %vm462, %v461, %v456
    %v464 = vadd.s32 %v396, 4294967216
    %v465 = vlaneseq
    %v466 = vshrl.u32 %v465, 7
    %v467 = vsub.s32 %v464, %v466
    %v468 = vrot.slane %v377, %v467
    %vm469 = vcmask 720512
    %v470 = vsel %vm469, %v468, %v463
    %v471 = vadd.s32 %v396, 4294967208
    %v472 = vlaneseq
    %v473 = vshrl.u32 %v472, 7
    %v474 = vsub.s32 %v471, %v473
    %v475 = vrot.slane %v379, %v474
    %vm476 = vcmask 786112
    %v477 = vsel %vm476, %v475, %v470
    %v478 = vadd.s32 %v396, 4294967200
    %v479 = vlaneseq
    %v480 = vshrl.u32 %v479, 7
    %v481 = vsub.s32 %v478, %v480
    %v482 = vrot.slane %v381, %v481
    %vm483 = vcmask 851712
    %v484 = vsel %vm483, %v482, %v477
    %vm486 = vcmask 843776
    %487 = vst.msk [vmem:[#allocation3] sm:$0x1] %vm486, %v484
    // Predicated region
    $region22: #{tpu_custom_call.1} parent=1 // pred_check
      _
    $region23: #{tpu_custom_call.1} parent=1 // pred_check_branch
      %489 = sbr.rel (0) target = $region25
    $region24: #{tpu_custom_call.1} parent=1 // pred_region
      %s491 = ssub.s32 16, 16
      %492 = vsyncadd [#allocation4], %s491
      %s494 = sshll.u32 [#allocation3], 4
      %s495 = int_to_ptr.vmem [resolvable:$true] %s494
      %497 = dma.vmem_to_hbm [thread:$0]  %s495, 16, %s5, [#allocation4]
    $region25: #{tpu_custom_call.1} parent=1 // pred_fallthru
      _
    // Predicated region
    $region26: #{tpu_custom_call.1} parent=1 // pred_check
      _
    $region27: #{tpu_custom_call.1} parent=1 // pred_check_branch
      %499 = sbr.rel (0) target = $region29
    $region28: #{tpu_custom_call.1} parent=1 // pred_region
      %500 = dma.done [#allocation4], 16
    $region29: #{tpu_custom_call.1} parent=1 // pred_fallthru
      _
    %501 = vsyncpa [#allocation4], 1

</llo_original>
